<compile_context>
chip_gen: v7x
topology: tpu7x:2x2x1
jax: 0.10.0
libtpu: 0.0.40
codegen_flags: <defaults>
</compile_context>

<pallas_src>
import functools

import jax
import jax.numpy as jnp
from jax.experimental import pallas as pl
from jax.experimental.pallas import tpu as pltpu

LANE = 128


def _round_up(n, m):
    return ((n + m - 1) // m) * m


def _pick_tile_b(B):
    """Cap the batch tile and aim for >=2 grid steps when B >= 32 (v7x has 2 TCs)."""
    if B < 32:
        return B                                   # tiny batch: launch-latency bound anyway
    half = _round_up((B + 1) // 2, 16)             # 16-row multiple (bf16 sublane packing)
    return min(256, half)                          # hard cap keeps VMEM bounded


# ---------------- Fused Pallas kernel ----------------

def _make_fused_mlp_kernel(num_layers):
    """num_layers = number of (W, b) pairs, including the final sigmoid head."""

    def kernel(*refs):
        x_ref = refs[0]
        o_ref = refs[-1]
        params = refs[1:-1]                        # (w0, b0, w1, b1, ..., wL, bL)
        h = x_ref[...]                             # bf16 activations (tile_b, F_pad)
        for layer in range(num_layers):            # static unroll over fixed layer list
            w_ref = params[2 * layer]
            b_ref = params[2 * layer + 1]
            # MXU matmul, bf16 operands, f32 accumulation.
            y = jnp.dot(h, w_ref[...], preferred_element_type=jnp.float32)
            y = y + b_ref[...]                     # bias with BN already folded in
            if layer < num_layers - 1:
                h = jnp.maximum(y, 0.0).astype(jnp.bfloat16)   # ReLU (+identity dropout)
            else:
                # Sigmoid: exp and approx reciprocal both land on the EUP slot.
                o_ref[...] = pl.reciprocal(1.0 + jnp.exp(-y), approx=True)

    return kernel


def mlp_pallas_forward(x_flat, weights, biases):
    """x_flat: (B, F_in_pad) bf16, weights[i]: (F_i_pad, F_{i+1}_pad) bf16,
    biases[i]: (1, F_{i+1}_pad) f32. Returns (B_pad, F_out_pad) f32 (B_pad >= B)."""
    B, F_in = x_flat.shape
    out_pad = weights[-1].shape[1]
    num_layers = len(weights)

    # --- batch tiling ---
    tile_b = _pick_tile_b(B)
    B_pad = _round_up(B, tile_b)
    if B_pad != B:
        x_flat = jnp.pad(x_flat, ((0, B_pad - B), (0, 0)))
    grid = (B_pad // tile_b,)

    in_specs = [pl.BlockSpec((tile_b, F_in), lambda i: (i, 0))]
    for w, b in zip(weights, biases):
        # Weights/biases ignore the batch grid index -> stay VMEM-resident.
        in_specs.append(pl.BlockSpec(w.shape, lambda i: (0, 0)))
        in_specs.append(pl.BlockSpec(b.shape, lambda i: (0, 0)))
    out_specs = pl.BlockSpec((tile_b, out_pad), lambda i: (i, 0))

    operands = [x_flat]
    for w, b in zip(weights, biases):
        operands += [w, b]

    # --- VMEM accounting (every input BlockSpec is double-buffered) ---
    w_bytes = sum(int(w.size) * w.dtype.itemsize for w in weights)
    b_bytes = sum(int(b.size) * b.dtype.itemsize for b in biases)
    x_tile_bytes = tile_b * F_in * 2               # bf16
    o_tile_bytes = tile_b * out_pad * 4            # f32, lane-dense at 128
    vmem_est = 2 * (x_tile_bytes + o_tile_bytes + w_bytes + b_bytes)
    compiler_kwargs = dict(dimension_semantics=("parallel",))
    if vmem_est > (12 << 20):                      # exceed v5e's 16 MiB default? raise it.
        compiler_kwargs["vmem_limit_bytes"] = int(min(vmem_est + (4 << 20), 64 << 20))

    # --- cost estimate so XLA schedules the call well in the surrounding graph ---
    flops = 2 * B_pad * sum(int(w.shape[0]) * int(w.shape[1]) for w in weights)
    bytes_accessed = (B_pad * F_in * 2) + w_bytes + b_bytes + (B_pad * out_pad * 4)
    transcendentals = B_pad * out_pad              # exp (+ approx reciprocal) in the epilogue

    return pl.pallas_call(
        _make_fused_mlp_kernel(num_layers),
        out_shape=jax.ShapeDtypeStruct((B_pad, out_pad), jnp.float32),
        grid=grid,
        in_specs=in_specs,
        out_specs=out_specs,
        compiler_params=pltpu.CompilerParams(**compiler_kwargs),
        cost_estimate=pl.CostEstimate(
            flops=flops,
            transcendentals=transcendentals,
            bytes_accessed=bytes_accessed,
        ),
    )(*operands)


# ---------------- Parameter build (fold BN, pad, cast) ----------------

def init_mlp_params(key, graph_size, layer_sizes, eps=1e-5):
    """Build Linear params with eval-mode SyncBatchNorm folded in, zero-padded to
    128-lane multiples; weights in bf16, biases in f32 (1, F_out_pad)."""
    in_size = graph_size * graph_size
    in_pad = _round_up(in_size, LANE)
    weights, biases = [], []
    for layer_size in layer_sizes:
        key, kw, kb, kg, kbeta, km, kv = jax.random.split(key, 7)
        bound = 1.0 / jnp.sqrt(in_size)
        # nn.Linear(in_size, layer_size) weight (out, in) stored transposed (in, out)
        w = jax.random.uniform(kw, (in_size, layer_size), jnp.float32, -bound, bound)
        b = jax.random.uniform(kb, (layer_size,), jnp.float32, -bound, bound)
        # SyncBatchNorm affine + running stats (eval mode)
        gamma = 1.0 + 0.1 * jax.random.normal(kg, (layer_size,), jnp.float32)
        beta = 0.1 * jax.random.normal(kbeta, (layer_size,), jnp.float32)
        mean = 0.1 * jax.random.normal(km, (layer_size,), jnp.float32)
        var = jnp.abs(1.0 + 0.1 * jax.random.normal(kv, (layer_size,), jnp.float32))
        scale = gamma / jnp.sqrt(var + eps)
        shift = beta - mean * scale
        w_f = w * scale[None, :]                   # fold BN scale into weights
        b_f = b * scale + shift                    # fold BN into bias
        out_pad = _round_up(layer_size, LANE)
        w_p = jnp.zeros((in_pad, out_pad), jnp.float32)
        w_p = w_p.at[:in_size, :layer_size].set(w_f)
        b_p = jnp.zeros((1, out_pad), jnp.float32).at[0, :layer_size].set(b_f)
        weights.append(w_p.astype(jnp.bfloat16))
        biases.append(b_p)
        in_size, in_pad = layer_size, out_pad
    # Final head: Linear(in_size, 1) -> Sigmoid, padded to 128 output lanes.
    key, kw, kb = jax.random.split(key, 3)
    bound = 1.0 / jnp.sqrt(in_size)
    w = jax.random.uniform(kw, (in_size, 1), jnp.float32, -bound, bound)
    b = jax.random.uniform(kb, (1,), jnp.float32, -bound, bound)
    out_pad = _round_up(1, LANE)
    w_p = jnp.zeros((in_pad, out_pad), jnp.float32).at[:in_size, :1].set(w)
    b_p = jnp.zeros((1, out_pad), jnp.float32).at[0, :1].set(b)
    weights.append(w_p.astype(jnp.bfloat16))
    biases.append(b_p)
    return weights, biases


@functools.partial(jax.jit, static_argnames=("graph_size",))
def mlp_forward(x, weights, biases, graph_size):
    # nn.Flatten(): (B, G, G) -> (B, G*G), cast to bf16, pad features to 128 lanes.
    B = x.shape[0]
    f = graph_size * graph_size
    f_pad = _round_up(f, LANE)
    h = x.reshape(B, f).astype(jnp.bfloat16)
    if f_pad != f:
        h = jnp.pad(h, ((0, 0), (0, f_pad - f)))
    y = mlp_pallas_forward(h, weights, biases)     # (B_pad, 128) padded
    return y[:B, :1]                               # (B, 1)


# ---------------- Reference (pure JAX, f32) ----------------

def mlp_reference(x, weights, biases, graph_size):
    B = x.shape[0]
    f = graph_size * graph_size
    f_pad = _round_up(f, LANE)
    h = x.reshape(B, f).astype(jnp.float32)
    if f_pad != f:
        h = jnp.pad(h, ((0, 0), (0, f_pad - f)))
    for i, (w, b) in enumerate(zip(weights, biases)):
        y = h @ w.astype(jnp.float32) + b
        if i < len(weights) - 1:
            h = jnp.maximum(y, 0.0)
        else:
            h = jax.nn.sigmoid(y)
    return h[:, :1]


if __name__ == "__main__":
    graph_size = 16
    architecture_specs = {"layers": [32, 32], "dropout_prob": 0.1}
    batch = 8

    key = jax.random.PRNGKey(0)
    key_x, key_p = jax.random.split(key)
    x = jax.random.normal(key_x, (batch, graph_size, graph_size), jnp.float32)

    weights, biases = init_mlp_params(key_p, graph_size, architecture_specs["layers"])

    out = mlp_forward(x, weights, biases, graph_size)
    jax.block_until_ready(out)

    assert out.shape == (batch, 1)
    assert bool(jnp.all(jnp.isfinite(out)))
    assert bool(jnp.all((out >= 0.0) & (out <= 1.0)))

    ref = mlp_reference(x, weights, biases, graph_size)
    assert bool(jnp.all(jnp.abs(out - ref) < 0.05)), "kernel output diverged from reference"

    # Exercise the multi-step grid path (>=2 blocks, non-multiple batch) as well.
    x_big = jax.random.normal(key_x, (100, graph_size, graph_size), jnp.float32)
    out_big = mlp_forward(x_big, weights, biases, graph_size)
    jax.block_until_ready(out_big)
    ref_big = mlp_reference(x_big, weights, biases, graph_size)
    assert out_big.shape == (100, 1)
    assert bool(jnp.all(jnp.abs(out_big - ref_big) < 0.05)), "tiled path diverged from reference"

    print("KERNEL_OK")
</pallas_src>

<mosaic_0001>
module attributes {stable_mosaic.version = 11 : i64} {
  func.func @kernel(%arg0: i32, %arg1: memref<8x256xbf16, #tpu.memory_space<vmem>>, %arg2: memref<256x128xbf16, #tpu.memory_space<vmem>>, %arg3: memref<1x128xf32, #tpu.memory_space<vmem>>, %arg4: memref<128x128xbf16, #tpu.memory_space<vmem>>, %arg5: memref<1x128xf32, #tpu.memory_space<vmem>>, %arg6: memref<128x128xbf16, #tpu.memory_space<vmem>>, %arg7: memref<1x128xf32, #tpu.memory_space<vmem>>, %arg8: memref<8x128xf32, #tpu.memory_space<vmem>>) attributes {dimension_semantics = [#tpu.dimension_semantics<parallel>], iteration_bounds = array<i64: 1>, scalar_prefetch = 0 : i64, scratch_operands = 0 : i64, tpu.core_type = #tpu.core_type<tc>, window_params = [{transform_indices = @transform_0, window_bounds = array<i64: 8, 256>}, {pipeline_mode = #tpu.pipeline_mode<synchronous>, transform_indices = @transform_1, window_bounds = array<i64: 256, 128>}, {pipeline_mode = #tpu.pipeline_mode<synchronous>, transform_indices = @transform_2, window_bounds = array<i64: 1, 128>}, {pipeline_mode = #tpu.pipeline_mode<synchronous>, transform_indices = @transform_3, window_bounds = array<i64: 128, 128>}, {pipeline_mode = #tpu.pipeline_mode<synchronous>, transform_indices = @transform_4, window_bounds = array<i64: 1, 128>}, {pipeline_mode = #tpu.pipeline_mode<synchronous>, transform_indices = @transform_5, window_bounds = array<i64: 128, 128>}, {pipeline_mode = #tpu.pipeline_mode<synchronous>, transform_indices = @transform_6, window_bounds = array<i64: 1, 128>}, {transform_indices = @transform_7, window_bounds = array<i64: 8, 128>}]} {
    %c0 = arith.constant 0 : index
    %c0_0 = arith.constant 0 : index
    %0 = vector.load %arg1[%c0, %c0_0] : memref<8x256xbf16, #tpu.memory_space<vmem>>, vector<8x256xbf16>
    %c0_1 = arith.constant 0 : index
    %c0_2 = arith.constant 0 : index
    %1 = vector.load %arg2[%c0_1, %c0_2] : memref<256x128xbf16, #tpu.memory_space<vmem>>, vector<256x128xbf16>
    %cst = arith.constant dense<0.000000e+00> : vector<8x128xf32>
    %2 = tpu.matmul %0, %1, %cst {dimension_numbers = #tpu.dot_dimension_numbers<[1], [0], [0], [1], [0, 0, 1, 1], [], []>} : vector<8x256xbf16>, vector<256x128xbf16>, vector<8x128xf32> -> vector<8x128xf32>
    %c0_3 = arith.constant 0 : index
    %c0_4 = arith.constant 0 : index
    %3 = vector.load %arg3[%c0_3, %c0_4] : memref<1x128xf32, #tpu.memory_space<vmem>>, vector<1x128xf32>
    %4 = vector.broadcast %3 : vector<1x128xf32> to vector<8x128xf32>
    %5 = arith.addf %2, %4 : vector<8x128xf32>
    %cst_5 = arith.constant 0.000000e+00 : f32
    %6 = vector.broadcast %cst_5 : f32 to vector<8x128xf32>
    %7 = arith.maximumf %5, %6 : vector<8x128xf32>
    %8 = arith.truncf %7 : vector<8x128xf32> to vector<8x128xbf16>
    %c0_6 = arith.constant 0 : index
    %c0_7 = arith.constant 0 : index
    %9 = vector.load %arg4[%c0_6, %c0_7] : memref<128x128xbf16, #tpu.memory_space<vmem>>, vector<128x128xbf16>
    %cst_8 = arith.constant dense<0.000000e+00> : vector<8x128xf32>
    %10 = tpu.matmul %8, %9, %cst_8 {dimension_numbers = #tpu.dot_dimension_numbers<[1], [0], [0], [1], [0, 0, 1, 1], [], []>} : vector<8x128xbf16>, vector<128x128xbf16>, vector<8x128xf32> -> vector<8x128xf32>
    %c0_9 = arith.constant 0 : index
    %c0_10 = arith.constant 0 : index
    %11 = vector.load %arg5[%c0_9, %c0_10] : memref<1x128xf32, #tpu.memory_space<vmem>>, vector<1x128xf32>
    %12 = vector.broadcast %11 : vector<1x128xf32> to vector<8x128xf32>
    %13 = arith.addf %10, %12 : vector<8x128xf32>
    %cst_11 = arith.constant 0.000000e+00 : f32
    %14 = vector.broadcast %cst_11 : f32 to vector<8x128xf32>
    %15 = arith.maximumf %13, %14 : vector<8x128xf32>
    %16 = arith.truncf %15 : vector<8x128xf32> to vector<8x128xbf16>
    %c0_12 = arith.constant 0 : index
    %c0_13 = arith.constant 0 : index
    %17 = vector.load %arg6[%c0_12, %c0_13] : memref<128x128xbf16, #tpu.memory_space<vmem>>, vector<128x128xbf16>
    %cst_14 = arith.constant dense<0.000000e+00> : vector<8x128xf32>
    %18 = tpu.matmul %16, %17, %cst_14 {dimension_numbers = #tpu.dot_dimension_numbers<[1], [0], [0], [1], [0, 0, 1, 1], [], []>} : vector<8x128xbf16>, vector<128x128xbf16>, vector<8x128xf32> -> vector<8x128xf32>
    %c0_15 = arith.constant 0 : index
    %c0_16 = arith.constant 0 : index
    %19 = vector.load %arg7[%c0_15, %c0_16] : memref<1x128xf32, #tpu.memory_space<vmem>>, vector<1x128xf32>
    %20 = vector.broadcast %19 : vector<1x128xf32> to vector<8x128xf32>
    %21 = arith.addf %18, %20 : vector<8x128xf32>
    %cst_17 = arith.constant 0.000000e+00 : f32
    %22 = vector.broadcast %cst_17 : f32 to vector<8x128xf32>
    %23 = arith.subf %22, %21 : vector<8x128xf32>
    %24 = math.exp %23 : vector<8x128xf32>
    %cst_18 = arith.constant 1.000000e+00 : f32
    %25 = vector.broadcast %cst_18 : f32 to vector<8x128xf32>
    %26 = arith.addf %25, %24 : vector<8x128xf32>
    %27 = tpu.reciprocal %26 {approx = true} : vector<8x128xf32> -> vector<8x128xf32>
    %c0_19 = arith.constant 0 : index
    %c0_20 = arith.constant 0 : index
    %28 = vector.load %arg8[%c0_19, %c0_20] : memref<8x128xf32, #tpu.memory_space<vmem>>, vector<8x128xf32>
    tpu.vector_store %arg8[%c0_19, %c0_20], %27 {strides = array<i32>} : memref<8x128xf32, #tpu.memory_space<vmem>>, vector<8x128xf32>,
    return
  }
  func.func @transform_0(%arg0: i32) -> (i32, i32) {
    %c0_i32 = arith.constant 0 : i32
    %c0_i32_0 = arith.constant 0 : i32
    return %arg0, %c0_i32 : i32, i32
  }
  func.func @transform_1(%arg0: i32) -> (i32, i32) {
    %c0_i32 = arith.constant 0 : i32
    %c0_i32_0 = arith.constant 0 : i32
    %c0_i32_1 = arith.constant 0 : i32
    return %c0_i32, %c0_i32_0 : i32, i32
  }
  func.func @transform_2(%arg0: i32) -> (i32, i32) {
    %c0_i32 = arith.constant 0 : i32
    %c0_i32_0 = arith.constant 0 : i32
    %c0_i32_1 = arith.constant 0 : i32
    return %c0_i32, %c0_i32_0 : i32, i32
  }
  func.func @transform_3(%arg0: i32) -> (i32, i32) {
    %c0_i32 = arith.constant 0 : i32
    %c0_i32_0 = arith.constant 0 : i32
    %c0_i32_1 = arith.constant 0 : i32
    return %c0_i32, %c0_i32_0 : i32, i32
  }
  func.func @transform_4(%arg0: i32) -> (i32, i32) {
    %c0_i32 = arith.constant 0 : i32
    %c0_i32_0 = arith.constant 0 : i32
    %c0_i32_1 = arith.constant 0 : i32
    return %c0_i32, %c0_i32_0 : i32, i32
  }
  func.func @transform_5(%arg0: i32) -> (i32, i32) {
    %c0_i32 = arith.constant 0 : i32
    %c0_i32_0 = arith.constant 0 : i32
    %c0_i32_1 = arith.constant 0 : i32
    return %c0_i32, %c0_i32_0 : i32, i32
  }
  func.func @transform_6(%arg0: i32) -> (i32, i32) {
    %c0_i32 = arith.constant 0 : i32
    %c0_i32_0 = arith.constant 0 : i32
    %c0_i32_1 = arith.constant 0 : i32
    return %c0_i32, %c0_i32_0 : i32, i32
  }
  func.func @transform_7(%arg0: i32) -> (i32, i32) {
    %c0_i32 = arith.constant 0 : i32
    %c0_i32_0 = arith.constant 0 : i32
    return %arg0, %c0_i32 : i32, i32
  }
}

</mosaic_0001>

<llo_original>
// kernel: mlp_forward.1
$region0: #{mlp_forward.1}
  #allocation0 [shape = 'u32[]', space=smem, size = 0x4, offset = 0x4, fixed_abs, tag = 'smem constant byte address 0x4 - core index']
  #allocation1 [shape = 'u32[144,128]{1,0:T(1,128)}', space=vmem, size = 0x12000, scoped, tag = 'internal scratch']
  %s0 = inlined_call_operand.vmem [shape: bf16[8,256], index: 0, kind: input, shape index: {}]
  %s1 = inlined_call_operand.vmem [shape: bf16[256,128], index: 1, kind: input, shape index: {}]
  %s2 = inlined_call_operand.vmem [shape: f32[1,128], index: 2, kind: input, shape index: {}]
  %s3 = inlined_call_operand.vmem [shape: bf16[128,128], index: 3, kind: input, shape index: {}]
  %s4 = inlined_call_operand.vmem [shape: f32[1,128], index: 4, kind: input, shape index: {}]
  %s5 = inlined_call_operand.vmem [shape: bf16[128,128], index: 5, kind: input, shape index: {}]
  %s6 = inlined_call_operand.vmem [shape: f32[1,128], index: 6, kind: input, shape index: {}]
  %s7 = inlined_call_operand.vmem [shape: f32[8,128], index: 7, kind: output, shape index: {}]
  %s8 = sld [smem:[#allocation0]]
  $region38: #{mlp_forward.1} parent=0
    _
  %s10 = ssub.s32 1, %s8
  %s11 = scalar_select 0, %s10, %s8
  // Predicated region
  $region2: #{mlp_forward.1} parent=0 // pred_check
    _
  $region3: #{mlp_forward.1} parent=0 // pred_check_branch
    %13 = sbr.rel (0) target = $region5
  $region4: #{mlp_forward.1} parent=0 // pred_region
    _
  $region5: #{mlp_forward.1} parent=0 // pred_fallthru
    _
  // Predicated region
  $region6: #{mlp_forward.1} parent=0 // pred_check
    _
  $region7: #{mlp_forward.1} parent=0 // pred_check_branch
    %15 = sbr.rel (0) target = $region9
  $region8: #{mlp_forward.1} parent=0 // pred_region
    _
  $region9: #{mlp_forward.1} parent=0 // pred_fallthru
    _
  // Predicated region
  $region10: #{mlp_forward.1} parent=0 // pred_check
    _
  $region11: #{mlp_forward.1} parent=0 // pred_check_branch
    %17 = sbr.rel (0) target = $region13
  $region12: #{mlp_forward.1} parent=0 // pred_region
    _
  $region13: #{mlp_forward.1} parent=0 // pred_fallthru
    _
  // Predicated region
  $region14: #{mlp_forward.1} parent=0 // pred_check
    _
  $region15: #{mlp_forward.1} parent=0 // pred_check_branch
    %19 = sbr.rel (0) target = $region17
  $region16: #{mlp_forward.1} parent=0 // pred_region
    _
  $region17: #{mlp_forward.1} parent=0 // pred_fallthru
    _
  // Predicated region
  $region18: #{mlp_forward.1} parent=0 // pred_check
    _
  $region19: #{mlp_forward.1} parent=0 // pred_check_branch
    %21 = sbr.rel (0) target = $region21
  $region20: #{mlp_forward.1} parent=0 // pred_region
    _
  $region21: #{mlp_forward.1} parent=0 // pred_fallthru
    _
  // Predicated region
  $region22: #{mlp_forward.1} parent=0 // pred_check
    _
  $region23: #{mlp_forward.1} parent=0 // pred_check_branch
    %23 = sbr.rel (0) target = $region25
  $region24: #{mlp_forward.1} parent=0 // pred_region
    _
  $region25: #{mlp_forward.1} parent=0 // pred_fallthru
    _
  // Predicated region
  $region26: #{mlp_forward.1} parent=0 // pred_check
    _
  $region27: #{mlp_forward.1} parent=0 // pred_check_branch
    %25 = sbr.rel (0) target = $region29
  $region28: #{mlp_forward.1} parent=0 // pred_region
    _
  $region29: #{mlp_forward.1} parent=0 // pred_fallthru
    _
  %v27 = vld [vmem:[%s0] sm:$0xff]
  %v28 = vld [vmem:[%s1] sm:$0xf]
  %v29 = vld [vmem:[%s1 + $0x4] sm:$0xf]
  %v30 = vld [vmem:[%s1 + $0x8] sm:$0xf]
  %v31 = vld [vmem:[%s1 + $0xc] sm:$0xf]
  %v32 = vld [vmem:[%s1 + $0x10] sm:$0xf]
  %v33 = vld [vmem:[%s1 + $0x14] sm:$0xf]
  %v34 = vld [vmem:[%s1 + $0x18] sm:$0xf]
  %v35 = vld [vmem:[%s1 + $0x1c] sm:$0xf]
  %v36 = vld [vmem:[%s1 + $0x20] sm:$0xf]
  %v37 = vld [vmem:[%s1 + $0x24] sm:$0xf]
  %v38 = vld [vmem:[%s1 + $0x28] sm:$0xf]
  %v39 = vld [vmem:[%s1 + $0x2c] sm:$0xf]
  %v40 = vld [vmem:[%s1 + $0x30] sm:$0xf]
  %v41 = vld [vmem:[%s1 + $0x34] sm:$0xf]
  %v42 = vld [vmem:[%s1 + $0x38] sm:$0xf]
  %v43 = vld [vmem:[%s1 + $0x3c] sm:$0xf]
  %v44 = vld [vmem:[%s1 + $0x40] sm:$0xf]
  %v45 = vld [vmem:[%s1 + $0x44] sm:$0xf]
  %v46 = vld [vmem:[%s1 + $0x48] sm:$0xf]
  %v47 = vld [vmem:[%s1 + $0x4c] sm:$0xf]
  %v48 = vld [vmem:[%s1 + $0x50] sm:$0xf]
  %v49 = vld [vmem:[%s1 + $0x54] sm:$0xf]
  %v50 = vld [vmem:[%s1 + $0x58] sm:$0xf]
  %v51 = vld [vmem:[%s1 + $0x5c] sm:$0xf]
  %v52 = vld [vmem:[%s1 + $0x60] sm:$0xf]
  %v53 = vld [vmem:[%s1 + $0x64] sm:$0xf]
  %v54 = vld [vmem:[%s1 + $0x68] sm:$0xf]
  %v55 = vld [vmem:[%s1 + $0x6c] sm:$0xf]
  %v56 = vld [vmem:[%s1 + $0x70] sm:$0xf]
  %v57 = vld [vmem:[%s1 + $0x74] sm:$0xf]
  %v58 = vld [vmem:[%s1 + $0x78] sm:$0xf]
  %v59 = vld [vmem:[%s1 + $0x7c] sm:$0xf]
  %v60 = vld [vmem:[%s2] sm:$0x1]
  %v62 = vlaneseq
  %v63 = vshrl.u32 %v62, 7
  %v64 = vsub.s32 0, %v63
  %v65 = vrot.slane %v60, %v64
  %v68 = vunpack.c.l.b16 %v27
  %v69 = vunpack.c.h.b16 %v27
  %v70 = vpack.c.b16 %v68, %v68
  %v71 = vpack.c.b16 %v69, %v69
  %v106 = vunpack.c.l.b16 %v28
  %v107 = vunpack.c.l.b16 %v29
  %v108 = vunpack.c.l.b16 %v30
  %v109 = vunpack.c.l.b16 %v31
  %v110 = vunpack.c.l.b16 %v32
  %v111 = vunpack.c.l.b16 %v33
  %v112 = vunpack.c.l.b16 %v34
  %v113 = vunpack.c.l.b16 %v35
  %v114 = vunpack.c.l.b16 %v36
  %v115 = vunpack.c.l.b16 %v37
  %v116 = vunpack.c.l.b16 %v38
  %v117 = vunpack.c.l.b16 %v39
  %v118 = vunpack.c.l.b16 %v40
  %v119 = vunpack.c.l.b16 %v41
  %v120 = vunpack.c.l.b16 %v42
  %v121 = vunpack.c.l.b16 %v43
  %v122 = vunpack.c.l.b16 %v44
  %v123 = vunpack.c.l.b16 %v45
  %v124 = vunpack.c.l.b16 %v46
  %v125 = vunpack.c.l.b16 %v47
  %v126 = vunpack.c.l.b16 %v48
  %v127 = vunpack.c.l.b16 %v49
  %v128 = vunpack.c.l.b16 %v50
  %v129 = vunpack.c.l.b16 %v51
  %v130 = vunpack.c.l.b16 %v52
  %v131 = vunpack.c.l.b16 %v53
  %v132 = vunpack.c.l.b16 %v54
  %v133 = vunpack.c.l.b16 %v55
  %v134 = vunpack.c.l.b16 %v56
  %v135 = vunpack.c.l.b16 %v57
  %v136 = vunpack.c.l.b16 %v58
  %v137 = vunpack.c.l.b16 %v59
  %v138 = vpack.c.b16 %v107, %v106
  %v139 = vpack.c.b16 %v109, %v108
  %v140 = vpack.c.b16 %v111, %v110
  %v141 = vpack.c.b16 %v113, %v112
  %v142 = vpack.c.b16 %v115, %v114
  %v143 = vpack.c.b16 %v117, %v116
  %v144 = vpack.c.b16 %v119, %v118
  %v145 = vpack.c.b16 %v121, %v120
  %v146 = vpack.c.b16 %v123, %v122
  %v147 = vpack.c.b16 %v125, %v124
  %v148 = vpack.c.b16 %v127, %v126
  %v149 = vpack.c.b16 %v129, %v128
  %v150 = vpack.c.b16 %v131, %v130
  %v151 = vpack.c.b16 %v133, %v132
  %v152 = vpack.c.b16 %v135, %v134
  %v153 = vpack.c.b16 %v137, %v136
  %170 = vmatprep.subr.bf16.mxu0 0
  %171 = vmatpush1.bf16.msra.mxu0 %v138
  %172 = vmatprep.subr.bf16.mxu0 0
  %173 = vmatpush1.bf16.msra.mxu0 %v139
  %174 = vmatprep.subr.bf16.mxu0 0
  %175 = vmatpush1.bf16.msra.mxu0 %v140
  %176 = vmatprep.subr.bf16.mxu0 0
  %177 = vmatpush1.bf16.msra.mxu0 %v141
  %178 = vmatprep.subr.bf16.mxu0 0
  %179 = vmatpush1.bf16.msra.mxu0 %v142
  %180 = vmatprep.subr.bf16.mxu0 0
  %181 = vmatpush1.bf16.msra.mxu0 %v143
  %182 = vmatprep.subr.bf16.mxu0 0
  %183 = vmatpush1.bf16.msra.mxu0 %v144
  %184 = vmatprep.subr.bf16.mxu0 0
  %185 = vmatpush1.bf16.msra.mxu0 %v145
  %186 = vmatprep.subr.bf16.mxu0 0
  %187 = vmatpush1.bf16.msra.mxu0 %v146
  %188 = vmatprep.subr.bf16.mxu0 0
  %189 = vmatpush1.bf16.msra.mxu0 %v147
  %190 = vmatprep.subr.bf16.mxu0 0
  %191 = vmatpush1.bf16.msra.mxu0 %v148
  %192 = vmatprep.subr.bf16.mxu0 0
  %193 = vmatpush1.bf16.msra.mxu0 %v149
  %194 = vmatprep.subr.bf16.mxu0 0
  %195 = vmatpush1.bf16.msra.mxu0 %v150
  %196 = vmatprep.subr.bf16.mxu0 0
  %197 = vmatpush1.bf16.msra.mxu0 %v151
  %198 = vmatprep.subr.bf16.mxu0 0
  %199 = vmatpush1.bf16.msra.mxu0 %v152
  %200 = vmatprep.subr.bf16.mxu0 0
  %201 = vmatpush1.bf16.msra.mxu0 %v153
  %202 = vmatprep.mubr.bf16.mxu0 %v71
  %203 = vmatmul.mubr.bf16.gmra.mrb[0].mxu0 %v70
  %v204 = vpop.f32.mrb[0].mxu0
  %v205 = vadd.f32 %v65, %v204
  %v206 = vpop.f32.mrb[0].mxu0
  %v207 = vpop.f32.mrb[0].mxu0
  %v208 = vpop.f32.mrb[0].mxu0
  %209 = vdwg.mxu0
  %v210 = vmax.f32 %v205, 0.0
  %v211 = vpack.c.bf16 %v210, %v210
  %v212 = vld [vmem:[%s3] sm:$0xf]
  %v213 = vld [vmem:[%s3 + $0x4] sm:$0xf]
  %v214 = vld [vmem:[%s3 + $0x8] sm:$0xf]
  %v215 = vld [vmem:[%s3 + $0xc] sm:$0xf]
  %v216 = vld [vmem:[%s3 + $0x10] sm:$0xf]
  %v217 = vld [vmem:[%s3 + $0x14] sm:$0xf]
  %v218 = vld [vmem:[%s3 + $0x18] sm:$0xf]
  %v219 = vld [vmem:[%s3 + $0x1c] sm:$0xf]
  %v220 = vld [vmem:[%s3 + $0x20] sm:$0xf]
  %v221 = vld [vmem:[%s3 + $0x24] sm:$0xf]
  %v222 = vld [vmem:[%s3 + $0x28] sm:$0xf]
  %v223 = vld [vmem:[%s3 + $0x2c] sm:$0xf]
  %v224 = vld [vmem:[%s3 + $0x30] sm:$0xf]
  %v225 = vld [vmem:[%s3 + $0x34] sm:$0xf]
  %v226 = vld [vmem:[%s3 + $0x38] sm:$0xf]
  %v227 = vld [vmem:[%s3 + $0x3c] sm:$0xf]
  %v228 = vld [vmem:[%s4] sm:$0x1]
  %v230 = vlaneseq
  %v231 = vshrl.u32 %v230, 7
  %v232 = vsub.s32 0, %v231
  %v233 = vrot.slane %v228, %v232
  %v251 = vunpack.c.l.b16 %v212
  %v252 = vunpack.c.l.b16 %v213
  %v253 = vunpack.c.l.b16 %v214
  %v254 = vunpack.c.l.b16 %v215
  %v255 = vunpack.c.l.b16 %v216
  %v256 = vunpack.c.l.b16 %v217
  %v257 = vunpack.c.l.b16 %v218
  %v258 = vunpack.c.l.b16 %v219
  %v259 = vunpack.c.l.b16 %v220
  %v260 = vunpack.c.l.b16 %v221
  %v261 = vunpack.c.l.b16 %v222
  %v262 = vunpack.c.l.b16 %v223
  %v263 = vunpack.c.l.b16 %v224
  %v264 = vunpack.c.l.b16 %v225
  %v265 = vunpack.c.l.b16 %v226
  %v266 = vunpack.c.l.b16 %v227
  %v267 = vpack.c.b16 %v252, %v251
  %v268 = vpack.c.b16 %v254, %v253
  %v269 = vpack.c.b16 %v256, %v255
  %v270 = vpack.c.b16 %v258, %v257
  %v271 = vpack.c.b16 %v260, %v259
  %v272 = vpack.c.b16 %v262, %v261
  %v273 = vpack.c.b16 %v264, %v263
  %v274 = vpack.c.b16 %v266, %v265
  %283 = vmatprep.subr.bf16.mxu0 0
  %284 = vmatpush1.bf16.msra.mxu0 %v267
  %285 = vmatprep.subr.bf16.mxu0 0
  %286 = vmatpush1.bf16.msra.mxu0 %v268
  %287 = vmatprep.subr.bf16.mxu0 0
  %288 = vmatpush1.bf16.msra.mxu0 %v269
  %289 = vmatprep.subr.bf16.mxu0 0
  %290 = vmatpush1.bf16.msra.mxu0 %v270
  %291 = vmatprep.subr.bf16.mxu0 0
  %292 = vmatpush1.bf16.msra.mxu0 %v271
  %293 = vmatprep.subr.bf16.mxu0 0
  %294 = vmatpush1.bf16.msra.mxu0 %v272
  %295 = vmatprep.subr.bf16.mxu0 0
  %296 = vmatpush1.bf16.msra.mxu0 %v273
  %297 = vmatprep.subr.bf16.mxu0 0
  %298 = vmatpush1.bf16.msra.mxu0 %v274
  %299 = vmatprep.subr.bf16.mxu0 0
  %300 = vmatpush1.bf16.msra.mxu0 0
  %301 = vmatprep.subr.bf16.mxu0 0
  %302 = vmatpush1.bf16.msra.mxu0 0
  %303 = vmatprep.subr.bf16.mxu0 0
  %304 = vmatpush1.bf16.msra.mxu0 0
  %305 = vmatprep.subr.bf16.mxu0 0
  %306 = vmatpush1.bf16.msra.mxu0 0
  %307 = vmatprep.subr.bf16.mxu0 0
  %308 = vmatpush1.bf16.msra.mxu0 0
  %309 = vmatprep.subr.bf16.mxu0 0
  %310 = vmatpush1.bf16.msra.mxu0 0
  %311 = vmatprep.subr.bf16.mxu0 0
  %312 = vmatpush1.bf16.msra.mxu0 0
  %313 = vmatprep.subr.bf16.mxu0 0
  %314 = vmatpush1.bf16.msra.mxu0 0
  %315 = vmatprep.mubr.bf16.mxu0 0
  %316 = vmatmul.mubr.bf16.gmra.mrb[0].mxu0 %v211
  %v317 = vpop.f32.mrb[0].mxu0
  %v318 = vadd.f32 %v233, %v317
  %v319 = vpop.f32.mrb[0].mxu0
  %v320 = vpop.f32.mrb[0].mxu0
  %v321 = vpop.f32.mrb[0].mxu0
  %322 = vdwg.mxu0
  %v323 = vmax.f32 %v318, 0.0
  %v324 = vpack.c.bf16 %v323, %v323
  %v325 = vld [vmem:[%s5] sm:$0xf]
  %v326 = vld [vmem:[%s5 + $0x4] sm:$0xf]
  %v327 = vld [vmem:[%s5 + $0x8] sm:$0xf]
  %v328 = vld [vmem:[%s5 + $0xc] sm:$0xf]
  %v329 = vld [vmem:[%s5 + $0x10] sm:$0xf]
  %v330 = vld [vmem:[%s5 + $0x14] sm:$0xf]
  %v331 = vld [vmem:[%s5 + $0x18] sm:$0xf]
  %v332 = vld [vmem:[%s5 + $0x1c] sm:$0xf]
  %v333 = vld [vmem:[%s5 + $0x20] sm:$0xf]
  %v334 = vld [vmem:[%s5 + $0x24] sm:$0xf]
  %v335 = vld [vmem:[%s5 + $0x28] sm:$0xf]
  %v336 = vld [vmem:[%s5 + $0x2c] sm:$0xf]
  %v337 = vld [vmem:[%s5 + $0x30] sm:$0xf]
  %v338 = vld [vmem:[%s5 + $0x34] sm:$0xf]
  %v339 = vld [vmem:[%s5 + $0x38] sm:$0xf]
  %v340 = vld [vmem:[%s5 + $0x3c] sm:$0xf]
  %v341 = vld [vmem:[%s6] sm:$0x1]
  %v343 = vlaneseq
  %v344 = vshrl.u32 %v343, 7
  %v345 = vsub.s32 0, %v344
  %v346 = vrot.slane %v341, %v345
  %v364 = vunpack.c.l.b16 %v325
  %v365 = vunpack.c.l.b16 %v326
  %v366 = vunpack.c.l.b16 %v327
  %v367 = vunpack.c.l.b16 %v328
  %v368 = vunpack.c.l.b16 %v329
  %v369 = vunpack.c.l.b16 %v330
  %v370 = vunpack.c.l.b16 %v331
  %v371 = vunpack.c.l.b16 %v332
  %v372 = vunpack.c.l.b16 %v333
  %v373 = vunpack.c.l.b16 %v334
  %v374 = vunpack.c.l.b16 %v335
  %v375 = vunpack.c.l.b16 %v336
  %v376 = vunpack.c.l.b16 %v337
  %v377 = vunpack.c.l.b16 %v338
  %v378 = vunpack.c.l.b16 %v339
  %v379 = vunpack.c.l.b16 %v340
  %v380 = vpack.c.b16 %v365, %v364
  %v381 = vpack.c.b16 %v367, %v366
  %v382 = vpack.c.b16 %v369, %v368
  %v383 = vpack.c.b16 %v371, %v370
  %v384 = vpack.c.b16 %v373, %v372
  %v385 = vpack.c.b16 %v375, %v374
  %v386 = vpack.c.b16 %v377, %v376
  %v387 = vpack.c.b16 %v379, %v378
  %396 = vmatprep.subr.bf16.mxu0 0
  %397 = vmatpush1.bf16.msra.mxu0 %v380
  %398 = vmatprep.subr.bf16.mxu0 0
  %399 = vmatpush1.bf16.msra.mxu0 %v381
  %400 = vmatprep.subr.bf16.mxu0 0
  %401 = vmatpush1.bf16.msra.mxu0 %v382
  %402 = vmatprep.subr.bf16.mxu0 0
  %403 = vmatpush1.bf16.msra.mxu0 %v383
  %404 = vmatprep.subr.bf16.mxu0 0
  %405 = vmatpush1.bf16.msra.mxu0 %v384
  %406 = vmatprep.subr.bf16.mxu0 0
  %407 = vmatpush1.bf16.msra.mxu0 %v385
  %408 = vmatprep.subr.bf16.mxu0 0
  %409 = vmatpush1.bf16.msra.mxu0 %v386
  %410 = vmatprep.subr.bf16.mxu0 0
  %411 = vmatpush1.bf16.msra.mxu0 %v387
  %412 = vmatprep.subr.bf16.mxu0 0
  %413 = vmatpush1.bf16.msra.mxu0 0
  %414 = vmatprep.subr.bf16.mxu0 0
  %415 = vmatpush1.bf16.msra.mxu0 0
  %416 = vmatprep.subr.bf16.mxu0 0
  %417 = vmatpush1.bf16.msra.mxu0 0
  %418 = vmatprep.subr.bf16.mxu0 0
  %419 = vmatpush1.bf16.msra.mxu0 0
  %420 = vmatprep.subr.bf16.mxu0 0
  %421 = vmatpush1.bf16.msra.mxu0 0
  %422 = vmatprep.subr.bf16.mxu0 0
  %423 = vmatpush1.bf16.msra.mxu0 0
  %424 = vmatprep.subr.bf16.mxu0 0
  %425 = vmatpush1.bf16.msra.mxu0 0
  %426 = vmatprep.subr.bf16.mxu0 0
  %427 = vmatpush1.bf16.msra.mxu0 0
  %428 = vmatprep.mubr.bf16.mxu0 0
  %429 = vmatmul.mubr.bf16.gmra.mrb[0].mxu0 %v324
  %v430 = vpop.f32.mrb[0].mxu0
  %v431 = vadd.f32 %v346, %v430
  %v432 = vpop.f32.mrb[0].mxu0
  %v433 = vpop.f32.mrb[0].mxu0
  %v434 = vpop.f32.mrb[0].mxu0
  %435 = vdwg.mxu0
  %v436 = vsub.f32 0.0, %v431
  %v437 = vmul.f32 %v436, 1.442695
  %v438 = vpow.pop %v437
  %v439 = vadd.f32 %v438, 1.0
  %v440 = vrcp.pop %v439
  %441 = vst [vmem:[%s7] sm:$0xff] %v440
  // Predicated region
  $region30: #{mlp_forward.1} parent=0 // pred_check
    _
  $region31: #{mlp_forward.1} parent=0 // pred_check_branch
    %443 = sbr.rel (0) target = $region33
  $region32: #{mlp_forward.1} parent=0 // pred_region
    _
  $region33: #{mlp_forward.1} parent=0 // pred_fallthru
    _
  // Predicated region
  $region34: #{mlp_forward.1} parent=0 // pred_check
    _
  $region35: #{mlp_forward.1} parent=0 // pred_check_branch
    %445 = sbr.rel (0) target = $region37
  $region36: #{mlp_forward.1} parent=0 // pred_region
    _
  $region37: #{mlp_forward.1} parent=0 // pred_fallthru
    _

</llo_original>
